<compile_context>
chip_gen: v5e
topology: v5e:2x2
jax: 0.10.0
libtpu: 0.0.40
codegen_flags: <defaults>
</compile_context>

<pallas_src>
import functools

import jax
import jax.numpy as jnp
from jax.experimental import pallas as pl
from jax.experimental.pallas import tpu as pltpu


# ----------------------------------------------------------------------------
# Kernels (pure elementwise, VPU + a couple of EUP divides / transcendentals)
# ----------------------------------------------------------------------------
def _aug_fwd_kernel(p_ref, u_ref, o_ref, *, eps):
    p = jnp.clip(p_ref[...], 0.0, 1.0)
    u = u_ref[...]
    a = p / (1.0 - p + eps) + eps
    b = u / (1.0 - u + eps) + eps
    # sigmoid((log a + log b)/T) > 0.5  <=>  a*b > 1   (T > 0, monotone)
    o_ref[...] = (a * b > 1.0).astype(o_ref.dtype)


def _aug_bwd_kernel(prob_ref, u_ref, g_ref, dp_ref, *, inv_temp, eps):
    prob = prob_ref[...]
    u = u_ref[...]
    g = g_ref[...]

    p = jnp.clip(prob, 0.0, 1.0)
    denom_p = 1.0 - p + eps
    a = p / denom_p + eps
    b = u / (1.0 - u + eps) + eps

    q = jnp.log(a) + jnp.log(b)
    y = jax.nn.sigmoid(q * inv_temp)            # y_soft (recomputed)
    dy_dq = y * (1.0 - y) * inv_temp            # d sigmoid(q/T) / dq
    dq_dp = ((1.0 + eps) / (denom_p * denom_p)) / a
    clip_mask = jnp.logical_and(prob >= 0.0, prob <= 1.0).astype(jnp.float32)

    dp_ref[...] = g * dy_dq * dq_dp * clip_mask


# ----------------------------------------------------------------------------
# Tiled elementwise launcher: flat [N] -> lane-dense (rows, cols) padded layout
# ----------------------------------------------------------------------------
def _round_up(x, m):
    return ((x + m - 1) // m) * m


def _tiled_elementwise(kernel, inputs, pad_values, n):
    """Run an elementwise kernel over flat length-n inputs, lane-dense tiled."""
    cols = 512 if n >= 8 * 512 else 128          # lane axis: multiple of 128
    total_rows = pl.cdiv(n, cols)
    block_rows = min(1024, _round_up(total_rows, 8))   # sublane axis: mult of 8
    grid_rows = pl.cdiv(total_rows, block_rows)
    padded_rows = grid_rows * block_rows
    padded_n = padded_rows * cols

    padded = []
    for x, pv in zip(inputs, pad_values):
        x = x.astype(jnp.float32).reshape(-1)
        if padded_n != n:
            pad = jnp.full((padded_n - n,), pv, dtype=jnp.float32)
            x = jnp.concatenate([x, pad])
        padded.append(x.reshape(padded_rows, cols))

    spec = pl.BlockSpec((block_rows, cols), lambda i: (i, 0))
    out = pl.pallas_call(
        kernel,
        out_shape=jax.ShapeDtypeStruct((padded_rows, cols), jnp.float32),
        grid=(grid_rows,),
        in_specs=[spec] * len(padded),
        out_specs=spec,
        compiler_params=pltpu.CompilerParams(
            dimension_semantics=("parallel",),
            vmem_limit_bytes=32 * 1024 * 1024,
        ),
    )(*padded)
    return out.reshape(-1)[:n]


# ----------------------------------------------------------------------------
# Public op with straight-through estimator via custom_vjp
# ----------------------------------------------------------------------------
def make_aug_sample(temperature: float = 1.0, eps: float = 1e-20):
    inv_temp = 1.0 / float(temperature)
    fwd_kernel = functools.partial(_aug_fwd_kernel, eps=eps)
    bwd_kernel = functools.partial(_aug_bwd_kernel, inv_temp=inv_temp, eps=eps)

    def _forward(prob, u):
        n = prob.shape[0]
        return _tiled_elementwise(fwd_kernel, [prob, u], [0.5, 0.5], n)

    def _backward(prob, u, g):
        n = prob.shape[0]
        return _tiled_elementwise(bwd_kernel, [prob, u, g], [0.5, 0.5, 0.0], n)

    @jax.custom_vjp
    def aug_sample(prob, u):
        """prob: [N] float32 bernoulli probs, u: [N] float32 uniform(0,1) noise."""
        return _forward(prob, u)

    def _vjp_fwd(prob, u):
        return _forward(prob, u), (prob, u)

    def _vjp_bwd(res, g):
        prob, u = res
        # Straight-through: value is y_hard, gradient flows through y_soft.
        return _backward(prob, u, g), jnp.zeros_like(u)

    aug_sample.defvjp(_vjp_fwd, _vjp_bwd)
    return aug_sample


if __name__ == "__main__":
    N = 128  # self.n

    # nn.Module init: self.prob = torch.empty(n).fill_(0.5)
    prob = jnp.full((N,), 0.5, dtype=jnp.float32)

    key = jax.random.PRNGKey(0)
    u = jax.random.uniform(key, (N,), dtype=jnp.float32, minval=0.0, maxval=1.0)

    aug_sample = make_aug_sample(temperature=1.0)  # self.temperature = 1

    out = jax.block_until_ready(aug_sample(prob, u))
    assert out.shape == (N,)
    assert bool(jnp.all((out == 0.0) | (out == 1.0)))  # hard {0,1} sample

    # Exercise the straight-through gradient (custom_vjp -> Pallas backward).
    grad_prob = jax.grad(lambda p: jnp.sum(aug_sample(p, u)))(prob)
    grad_prob = jax.block_until_ready(grad_prob)
    assert grad_prob.shape == (N,)
    assert bool(jnp.all(jnp.isfinite(grad_prob)))

    print("KERNEL_OK")
</pallas_src>

<mosaic_0001>
module attributes {stable_mosaic.version = 11 : i64} {
  func.func @_aug_fwd_kernel(%arg0: i32, %arg1: memref<8x128xf32, #tpu.memory_space<vmem>>, %arg2: memref<8x128xf32, #tpu.memory_space<vmem>>, %arg3: memref<8x128xf32, #tpu.memory_space<vmem>>) attributes {dimension_semantics = [#tpu.dimension_semantics<parallel>], iteration_bounds = array<i64: 1>, scalar_prefetch = 0 : i64, scratch_operands = 0 : i64, tpu.core_type = #tpu.core_type<tc>, window_params = [{transform_indices = @transform_0, window_bounds = array<i64: 8, 128>}, {transform_indices = @transform_1, window_bounds = array<i64: 8, 128>}, {transform_indices = @transform_2, window_bounds = array<i64: 8, 128>}]} {
    %c0 = arith.constant 0 : index
    %c0_0 = arith.constant 0 : index
    %0 = vector.load %arg1[%c0, %c0_0] : memref<8x128xf32, #tpu.memory_space<vmem>>, vector<8x128xf32>
    %cst = arith.constant 0.000000e+00 : f32
    %cst_1 = arith.constant 1.000000e+00 : f32
    %1 = vector.broadcast %cst : f32 to vector<8x128xf32>
    %2 = arith.maximumf %1, %0 : vector<8x128xf32>
    %3 = vector.broadcast %cst_1 : f32 to vector<8x128xf32>
    %4 = arith.minimumf %3, %2 : vector<8x128xf32>
    %c0_2 = arith.constant 0 : index
    %c0_3 = arith.constant 0 : index
    %5 = vector.load %arg2[%c0_2, %c0_3] : memref<8x128xf32, #tpu.memory_space<vmem>>, vector<8x128xf32>
    %cst_4 = arith.constant 1.000000e+00 : f32
    %6 = vector.broadcast %cst_4 : f32 to vector<8x128xf32>
    %7 = arith.subf %6, %4 : vector<8x128xf32>
    %cst_5 = arith.constant 9.99999968E-21 : f32
    %8 = vector.broadcast %cst_5 : f32 to vector<8x128xf32>
    %9 = arith.addf %7, %8 : vector<8x128xf32>
    %10 = arith.divf %4, %9 : vector<8x128xf32>
    %cst_6 = arith.constant 9.99999968E-21 : f32
    %11 = vector.broadcast %cst_6 : f32 to vector<8x128xf32>
    %12 = arith.addf %10, %11 : vector<8x128xf32>
    %cst_7 = arith.constant 1.000000e+00 : f32
    %13 = vector.broadcast %cst_7 : f32 to vector<8x128xf32>
    %14 = arith.subf %13, %5 : vector<8x128xf32>
    %cst_8 = arith.constant 9.99999968E-21 : f32
    %15 = vector.broadcast %cst_8 : f32 to vector<8x128xf32>
    %16 = arith.addf %14, %15 : vector<8x128xf32>
    %17 = arith.divf %5, %16 : vector<8x128xf32>
    %cst_9 = arith.constant 9.99999968E-21 : f32
    %18 = vector.broadcast %cst_9 : f32 to vector<8x128xf32>
    %19 = arith.addf %17, %18 : vector<8x128xf32>
    %20 = arith.mulf %12, %19 : vector<8x128xf32>
    %cst_10 = arith.constant 1.000000e+00 : f32
    %21 = vector.broadcast %cst_10 : f32 to vector<8x128xf32>
    %22 = arith.cmpf ogt, %20, %21 : vector<8x128xf32>
    %23 = arith.extui %22 : vector<8x128xi1> to vector<8x128xi32>
    %24 = arith.sitofp %23 : vector<8x128xi32> to vector<8x128xf32>
    %c0_11 = arith.constant 0 : index
    %c0_12 = arith.constant 0 : index
    %25 = vector.load %arg3[%c0_11, %c0_12] : memref<8x128xf32, #tpu.memory_space<vmem>>, vector<8x128xf32>
    tpu.vector_store %arg3[%c0_11, %c0_12], %24 {strides = array<i32>} : memref<8x128xf32, #tpu.memory_space<vmem>>, vector<8x128xf32>,
    return
  }
  func.func @transform_0(%arg0: i32) -> (i32, i32) {
    %c0_i32 = arith.constant 0 : i32
    %c0_i32_0 = arith.constant 0 : i32
    return %arg0, %c0_i32 : i32, i32
  }
  func.func @transform_1(%arg0: i32) -> (i32, i32) {
    %c0_i32 = arith.constant 0 : i32
    %c0_i32_0 = arith.constant 0 : i32
    return %arg0, %c0_i32 : i32, i32
  }
  func.func @transform_2(%arg0: i32) -> (i32, i32) {
    %c0_i32 = arith.constant 0 : i32
    %c0_i32_0 = arith.constant 0 : i32
    return %arg0, %c0_i32 : i32, i32
  }
}

</mosaic_0001>

<llo_original>
// kernel: tpu_custom_call.1
$region0: #{tpu_custom_call.1}
  #allocation0 [shape = 'u32[]', space=smem, size = 0x4, offset = 0x4, fixed_abs, tag = 'smem constant byte address 0x4 - core index']
  #allocation1 [shape = 'u32[72,128]{1,0:T(1,128)}', space=vmem, size = 0x9000, scoped, tag = 'internal scratch']
  %s0 = inlined_call_operand.hbm [shape: f32[8,128], index: 0, kind: input, shape index: {}]
  %s1 = inlined_call_operand.hbm [shape: f32[8,128], index: 1, kind: input, shape index: {}]
  %s2 = inlined_call_operand.hbm [shape: f32[8,128], index: 2, kind: output, shape index: {}]
  %s3 = sld [smem:[#allocation0]]
  $region26: #{tpu_custom_call.1} parent=0
    _
  %s5 = ssub.s32 1, %s3
  %s6 = scalar_select 0, %s5, %s3
  $region1: #{tpu_custom_call.1} parent=0
    #allocation2 [shape = 'u8[4096]{0}', space=vmem, size = 0x1000, scoped, tag = 'input window, operand 0, single buffered']
    #allocation3 [shape = 's32[1]{0}', space=sflag, size = 0x4, scoped, tag = 'scoped memory for tpu_custom_call.1']
    #allocation4 [shape = 's32[1]{0}', space=sflag, size = 0x4, scoped, tag = 'scoped memory for tpu_custom_call.1']
    #allocation5 [shape = 'u8[4096]{0}', space=vmem, size = 0x1000, scoped, tag = 'input window, operand 1, single buffered']
    #allocation6 [shape = 's32[1]{0}', space=sflag, size = 0x4, scoped, tag = 'scoped memory for tpu_custom_call.1']
    #allocation7 [shape = 'u8[4096]{0}', space=vmem, size = 0x1000, scoped, tag = 'output window, operand 0, single buffered']
    %7 = vsyncpa [#allocation3], 0
    %8 = vsyncpa [#allocation6], 0
    %9 = vsyncpa [#allocation4], 0
    // Predicated region
    $region2: #{tpu_custom_call.1} parent=1 // pred_check
      _
    $region3: #{tpu_custom_call.1} parent=1 // pred_check_branch
      %11 = sbr.rel (0) target = $region5
    $region4: #{tpu_custom_call.1} parent=1 // pred_region
      %13 = vsyncadd [#allocation3], 0
      %s15 = sshll.u32 %s0, 4
      %s16 = int_to_ptr.hbm [resolvable:$true] %s15
      %s17 = sshll.u32 [#allocation2], 4
      %s18 = int_to_ptr.vmem [resolvable:$true] %s17
      %20 = dma.hbm_to_vmem [thread:$0]  %s16, 128, %s18, [#allocation3]
    $region5: #{tpu_custom_call.1} parent=1 // pred_fallthru
      _
    // Predicated region
    $region6: #{tpu_custom_call.1} parent=1 // pred_check
      _
    $region7: #{tpu_custom_call.1} parent=1 // pred_check_branch
      %22 = sbr.rel (0) target = $region9
    $region8: #{tpu_custom_call.1} parent=1 // pred_region
      %24 = vsyncadd [#allocation6], 0
      %s26 = sshll.u32 %s1, 4
      %s27 = int_to_ptr.hbm [resolvable:$true] %s26
      %s28 = sshll.u32 [#allocation5], 4
      %s29 = int_to_ptr.vmem [resolvable:$true] %s28
      %31 = dma.hbm_to_vmem [thread:$0]  %s27, 128, %s29, [#allocation6]
    $region9: #{tpu_custom_call.1} parent=1 // pred_fallthru
      _
    // Predicated region
    $region10: #{tpu_custom_call.1} parent=1 // pred_check
      _
    $region11: #{tpu_custom_call.1} parent=1 // pred_check_branch
      %33 = sbr.rel (0) target = $region13
    $region12: #{tpu_custom_call.1} parent=1 // pred_region
      %35 = dma.done [#allocation3], 128
    $region13: #{tpu_custom_call.1} parent=1 // pred_fallthru
      _
    // Predicated region
    $region14: #{tpu_custom_call.1} parent=1 // pred_check
      _
    $region15: #{tpu_custom_call.1} parent=1 // pred_check_branch
      %37 = sbr.rel (0) target = $region17
    $region16: #{tpu_custom_call.1} parent=1 // pred_region
      %39 = dma.done [#allocation6], 128
    $region17: #{tpu_custom_call.1} parent=1 // pred_fallthru
      _
    %v40 = vld [vmem:[#allocation2] sm:$0xff]
    %v41 = vmax.f32 %v40, 0.0
    %v42 = vmin.f32 %v41, 1.0
    %v43 = vld [vmem:[#allocation5] sm:$0xff]
    %v44 = vsub.f32 1.0, %v42
    %v45 = vadd.f32 %v44, 1e-20
    %v46 = vrcp.pop %v45
    %v47 = vmul.f32 %v45, %v46
    %v48 = vsub.f32 1.0, %v47
    %v49 = vmul.f32 %v46, %v48
    %v50 = vadd.f32 %v46, %v49
    %vm51 = vweird.f32 %v45
    %vm52 = vweird.f32 %v46
    %vm53 = vmor %vm51, %vm52
    %v54 = vsel %vm53, %v46, %v50
    %v55 = vand.u32 2147483647, %v45
    %vm56 = vcmp.eq.f32.partialorder %v55, 8.507059e+37
    %v57 = vand.u32 %v45, 2147483648
    %v58 = vor.u32 1.1754944e-38, %v57
    %v59 = vsel %vm56, %v58, %v54
    %v60 = vmul.f32 %v42, %v59
    %v61 = vadd.f32 %v60, 1e-20
    %v62 = vsub.f32 1.0, %v43
    %v63 = vadd.f32 %v62, 1e-20
    %v64 = vrcp.pop %v63
    %v65 = vmul.f32 %v63, %v64
    %v66 = vsub.f32 1.0, %v65
    %v67 = vmul.f32 %v64, %v66
    %v68 = vadd.f32 %v64, %v67
    %vm69 = vweird.f32 %v63
    %vm70 = vweird.f32 %v64
    %vm71 = vmor %vm69, %vm70
    %v72 = vsel %vm71, %v64, %v68
    %v73 = vand.u32 2147483647, %v63
    %vm74 = vcmp.eq.f32.partialorder %v73, 8.507059e+37
    %v75 = vand.u32 %v63, 2147483648
    %v76 = vor.u32 1.1754944e-38, %v75
    %v77 = vsel %vm74, %v76, %v72
    %v78 = vmul.f32 %v43, %v77
    %v79 = vadd.f32 %v78, 1e-20
    %v80 = vmul.f32 %v61, %v79
    %vm81 = vcmp.gt.f32.partialorder %v80, 1.0
    %v82 = vsel %vm81, 1, 0
    %v83 = vcvt.s32.f32 %v82
    %84 = vst [vmem:[#allocation7] sm:$0xff] %v83
    // Predicated region
    $region18: #{tpu_custom_call.1} parent=1 // pred_check
      _
    $region19: #{tpu_custom_call.1} parent=1 // pred_check_branch
      %86 = sbr.rel (0) target = $region21
    $region20: #{tpu_custom_call.1} parent=1 // pred_region
      %88 = vsyncadd [#allocation4], 0
      %s90 = sshll.u32 [#allocation7], 4
      %s91 = int_to_ptr.vmem [resolvable:$true] %s90
      %s92 = sshll.u32 %s2, 4
      %s93 = int_to_ptr.hbm [resolvable:$true] %s92
      %95 = dma.vmem_to_hbm [thread:$0]  %s91, 128, %s93, [#allocation4]
    $region21: #{tpu_custom_call.1} parent=1 // pred_fallthru
      _
    // Predicated region
    $region22: #{tpu_custom_call.1} parent=1 // pred_check
      _
    $region23: #{tpu_custom_call.1} parent=1 // pred_check_branch
      %97 = sbr.rel (0) target = $region25
    $region24: #{tpu_custom_call.1} parent=1 // pred_region
      %99 = dma.done [#allocation4], 128
    $region25: #{tpu_custom_call.1} parent=1 // pred_fallthru
      _
    %100 = vsyncpa [#allocation3], 1
    %101 = vsyncpa [#allocation6], 1
    %102 = vsyncpa [#allocation4], 1

</llo_original>
